<compile_context>
chip_gen: v6e
topology: v6e:2x2x1
jax: 0.10.0
libtpu: 0.0.40
codegen_flags: <defaults>
</compile_context>

<pallas_src>
import functools

import jax
import jax.numpy as jnp
from jax import lax
from jax.experimental import pallas as pl
from jax.experimental.pallas import tpu as pltpu
import numpy as np

_LANE = 128
_SUBLANE = 8


def _round_up(x, m):
    return ((x + m - 1) // m) * m


def rnn_chunk_kernel(x_ref, wih_ref, whh_ref, b_ref, out_ref, h_ref):
    """One T-chunk of a vanilla (tanh) RNN.

    x_ref   : (Tc, Bp, Ep)  time-major embedded inputs for this chunk
    wih_ref : (Ep, Hp)      W_ih^T (zero-padded, resident; constant index_map)
    whh_ref : (Hp, Hp)      W_hh^T (zero-padded, resident; constant index_map)
    b_ref   : (1, Hp)       b_ih + b_hh (zero-padded)
    out_ref : (Tc, Bp, Hp)  per-step hidden states for this chunk
    h_ref   : (Bp, Hp)      VMEM scratch carrying h across chunks
    """
    Tc, Bp, Ep = x_ref.shape
    Hp = whh_ref.shape[0]

    @pl.when(pl.program_id(0) == 0)
    def _init():
        h_ref[...] = jnp.zeros_like(h_ref)

    # ---- Phase 1: chunk-local input projection (one MXU matmul) ----------
    # Staged in this chunk's output block; bias broadcast folded in once.
    x_all = x_ref[...].reshape(Tc * Bp, Ep)
    xp = jnp.dot(x_all, wih_ref[...], preferred_element_type=jnp.float32)
    xp = xp + b_ref[...]
    out_ref[...] = xp.reshape(Tc, Bp, Hp)

    # ---- Phase 2: the only truly sequential part of the recurrence -------
    if Hp <= _LANE:
        # Small W_hh: hoisting keeps only Hp^2/1024 <= 16 vregs live.
        whh = whh_ref[...]

        def step(t, h):
            pre = out_ref[t] + jnp.dot(h, whh, preferred_element_type=jnp.float32)
            h_new = jnp.tanh(pre)
            out_ref[t] = h_new                      # lane-dense full-vreg store
            return h_new
    else:
        # Large W_hh: re-load per step (VMEM vld is free under the serial
        # MXU latency; avoids pinning the vreg file across the loop).
        def step(t, h):
            pre = out_ref[t] + jnp.dot(h, whh_ref[...],
                                       preferred_element_type=jnp.float32)
            h_new = jnp.tanh(pre)
            out_ref[t] = h_new
            return h_new

    h_final = lax.fori_loop(0, Tc, step, h_ref[...],
                            unroll=(Tc if Tc <= 32 else 8))
    h_ref[...] = h_final


@functools.partial(jax.jit, static_argnums=(5, 6))
def _word_rnn_forward(ids_bt, emb_pad, wih_t, whh_t, bias, hidden_size,
                      embedding_dim):
    """ids_bt: (B, T) int32 token ids.  emb_pad: (V, Ep) lane-padded table.
    wih_t (Ep, Hp), whh_t (Hp, Hp), bias (1, Hp) pre-padded in __init__.
    Returns (out (B, T, H), h_n (B, H))."""
    B, T = ids_bt.shape
    H = hidden_size
    Ep = emb_pad.shape[1]
    Hp = whh_t.shape[0]
    Bp = _round_up(B, _SUBLANE)

    # T-chunking: pad T up to a whole number of chunks.
    Tc = min(T, 64)
    num_chunks = pl.cdiv(T, Tc)
    T_pad = num_chunks * Tc

    # Time-major gather straight into the padded layout: transpose the tiny
    # (B,T) id matrix, pad it, gather from the pre-padded table.
    ids_tb = jnp.zeros((T_pad, Bp), ids_bt.dtype).at[:T, :B].set(
        jnp.transpose(ids_bt))
    x_tbe = jnp.take(emb_pad, ids_tb, axis=0)          # (T_pad, Bp, Ep)

    # Explicit VMEM budget: double-buffered x/out chunks + resident weights
    # + the h scratch, with 2x headroom, clamped well under v7x's 64 MiB.
    vmem_bytes = 4 * (2 * Tc * Bp * (Ep + Hp)
                      + 2 * (Ep * Hp + Hp * Hp + _SUBLANE * Hp)
                      + Bp * Hp)
    vmem_limit = int(min(max(2 * vmem_bytes, 4 << 20), 48 << 20))

    out_pad = pl.pallas_call(
        rnn_chunk_kernel,
        out_shape=jax.ShapeDtypeStruct((T_pad, Bp, Hp), jnp.float32),
        grid_spec=pltpu.PrefetchScalarGridSpec(
            num_scalar_prefetch=0,
            grid=(num_chunks,),
            in_specs=[
                pl.BlockSpec((Tc, Bp, Ep), lambda c: (c, 0, 0)),  # x chunk
                pl.BlockSpec((Ep, Hp), lambda c: (0, 0)),         # W_ih^T
                pl.BlockSpec((Hp, Hp), lambda c: (0, 0)),         # W_hh^T
                pl.BlockSpec((1, Hp), lambda c: (0, 0)),          # bias
            ],
            out_specs=pl.BlockSpec((Tc, Bp, Hp), lambda c: (c, 0, 0)),
            scratch_shapes=[pltpu.VMEM((Bp, Hp), jnp.float32)],   # carried h
        ),
        compiler_params=pltpu.CompilerParams(
            dimension_semantics=("arbitrary",),   # sequential recurrence axis
            vmem_limit_bytes=vmem_limit,
        ),
    )(x_tbe, wih_t, whh_t, bias)

    out_bth = jnp.transpose(out_pad[:T, :B, :H], (1, 0, 2))      # (B, T, H)
    h_n = out_pad[T - 1, :B, :H]                                  # (B, H)
    return out_bth, h_n


class WordModelPallas:
    """Pallas/JAX equivalent of the PyTorch Word_model (embedding + vanilla RNN)."""

    def __init__(self, vocab_size=1000, embedding_dim=50, hidden_size=50, seed=0):
        assert embedding_dim == hidden_size, "nn.RNN(hidden, hidden) expects E == H"
        key = jax.random.PRNGKey(seed)
        k_emb, k_wih, k_whh, k_bih, k_bhh = jax.random.split(key, 5)

        # nn.Embedding default init: N(0, 1)
        self.embedding = jax.random.normal(
            k_emb, (vocab_size, embedding_dim), dtype=jnp.float32)

        # nn.RNN default init: U(-1/sqrt(H), 1/sqrt(H)), PyTorch layouts.
        bound = 1.0 / np.sqrt(hidden_size)
        self.w_ih = jax.random.uniform(
            k_wih, (hidden_size, embedding_dim), jnp.float32, -bound, bound)
        self.w_hh = jax.random.uniform(
            k_whh, (hidden_size, hidden_size), jnp.float32, -bound, bound)
        self.b_ih = jax.random.uniform(
            k_bih, (hidden_size,), jnp.float32, -bound, bound)
        self.b_hh = jax.random.uniform(
            k_bhh, (hidden_size,), jnp.float32, -bound, bound)
        self.hidden_size = hidden_size
        self.embedding_dim = embedding_dim

        # --- one-time padded / transposed layouts consumed by the kernel ---
        Ep = _round_up(embedding_dim, _LANE)
        Hp = _round_up(hidden_size, _LANE)
        # Lane-padded embedding table (extra E columns are zero).
        self.embedding_pad = jnp.zeros((vocab_size, Ep), jnp.float32).at[
            :, :embedding_dim].set(self.embedding)
        # Zero-padded transposed weights / combined bias: padded hidden lanes
        # stay exactly 0 through the recurrence (zero weight cols + zero bias).
        self.wih_t = jnp.zeros((Ep, Hp), jnp.float32).at[
            :embedding_dim, :hidden_size].set(jnp.transpose(self.w_ih))
        self.whh_t = jnp.zeros((Hp, Hp), jnp.float32).at[
            :hidden_size, :hidden_size].set(jnp.transpose(self.w_hh))
        self.bias = jnp.zeros((1, Hp), jnp.float32).at[
            0, :hidden_size].set(self.b_ih + self.b_hh)

    def __call__(self, sentences):
        """sentences: (B, T) int32 token ids.
        Returns (output (B, T, H), h (1, B, H)) — same as PyTorch nn.RNN."""
        out, h_n = _word_rnn_forward(
            sentences, self.embedding_pad, self.wih_t, self.whh_t, self.bias,
            self.hidden_size, self.embedding_dim)
        return out, h_n[None, :, :]                                # (1, B, H)


def _reference_forward(model, sentences):
    """Pure-JAX reference (lax.scan RNN) for numerical sanity checking."""
    emb = jnp.take(model.embedding, sentences, axis=0)             # (B, T, E)
    B, T, E = emb.shape
    H = model.hidden_size
    wih_t = model.w_ih.T
    whh_t = model.w_hh.T
    bias = model.b_ih + model.b_hh

    def step(h, x_t):
        h_new = jnp.tanh(x_t @ wih_t + h @ whh_t + bias)
        return h_new, h_new

    h0 = jnp.zeros((B, H), jnp.float32)
    h_last, ys = lax.scan(step, h0, jnp.transpose(emb, (1, 0, 2)))
    return jnp.transpose(ys, (1, 0, 2)), h_last[None, :, :]


if __name__ == "__main__":
    # Small, deterministic example shapes: batch=2, seq_len=8, vocab=1000, E=H=50.
    B, T = 2, 8
    VOCAB, E, H = 1000, 50, 50

    model = WordModelPallas(vocab_size=VOCAB, embedding_dim=E, hidden_size=H, seed=0)

    key = jax.random.PRNGKey(0)
    sentences = jax.random.randint(key, (B, T), 0, VOCAB, dtype=jnp.int32)

    out, h = model(sentences)
    out = jax.block_until_ready(out)
    h = jax.block_until_ready(h)

    assert out.shape == (B, T, H), out.shape
    assert h.shape == (1, B, H), h.shape

    # Numerical check against a pure-JAX lax.scan reference.
    out_ref, h_ref = _reference_forward(model, sentences)
    np.testing.assert_allclose(np.asarray(out), np.asarray(out_ref),
                               rtol=1e-5, atol=1e-5)
    np.testing.assert_allclose(np.asarray(h), np.asarray(h_ref),
                               rtol=1e-5, atol=1e-5)

    print("KERNEL_OK")
</pallas_src>

<mosaic_0001>
module attributes {stable_mosaic.version = 11 : i64} {
  func.func @rnn_chunk_kernel(%arg0: i32, %arg1: memref<8x8x128xf32, #tpu.memory_space<vmem>>, %arg2: memref<128x128xf32, #tpu.memory_space<vmem>>, %arg3: memref<128x128xf32, #tpu.memory_space<vmem>>, %arg4: memref<1x128xf32, #tpu.memory_space<vmem>>, %arg5: memref<8x8x128xf32, #tpu.memory_space<vmem>>, %arg6: memref<8x128xf32, #tpu.memory_space<vmem>>) attributes {dimension_semantics = [#tpu.dimension_semantics<arbitrary>], iteration_bounds = array<i64: 1>, scalar_prefetch = 0 : i64, scratch_operands = 1 : i64, tpu.core_type = #tpu.core_type<tc>, window_params = [{transform_indices = @transform_0, window_bounds = array<i64: 8, 8, 128>}, {pipeline_mode = #tpu.pipeline_mode<synchronous>, transform_indices = @transform_1, window_bounds = array<i64: 128, 128>}, {pipeline_mode = #tpu.pipeline_mode<synchronous>, transform_indices = @transform_2, window_bounds = array<i64: 128, 128>}, {pipeline_mode = #tpu.pipeline_mode<synchronous>, transform_indices = @transform_3, window_bounds = array<i64: 1, 128>}, {transform_indices = @transform_4, window_bounds = array<i64: 8, 8, 128>}]} {
    %c0_i32 = arith.constant 0 : i32
    %0 = arith.cmpi eq, %arg0, %c0_i32 : i32
    %1 = arith.extui %0 : i1 to i32
    %c0_i32_0 = arith.constant 0 : i32
    %2 = arith.cmpi ne, %1, %c0_i32_0 : i32
    scf.if %2 {
      %cst_57 = arith.constant 0.000000e+00 : f32
      %95 = vector.broadcast %cst_57 : f32 to vector<8x128xf32>
      %c0_58 = arith.constant 0 : index
      %c0_59 = arith.constant 0 : index
      %96 = vector.load %arg6[%c0_58, %c0_59] : memref<8x128xf32, #tpu.memory_space<vmem>>, vector<8x128xf32>
      tpu.vector_store %arg6[%c0_58, %c0_59], %95 {strides = array<i32>} : memref<8x128xf32, #tpu.memory_space<vmem>>, vector<8x128xf32>,
    } else {
    }
    %c0 = arith.constant 0 : index
    %c0_1 = arith.constant 0 : index
    %c0_2 = arith.constant 0 : index
    %3 = vector.load %arg1[%c0, %c0_1, %c0_2] : memref<8x8x128xf32, #tpu.memory_space<vmem>>, vector<8x8x128xf32>
    %4 = vector.shape_cast %3 : vector<8x8x128xf32> to vector<64x128xf32>
    %c0_3 = arith.constant 0 : index
    %c0_4 = arith.constant 0 : index
    %5 = vector.load %arg2[%c0_3, %c0_4] : memref<128x128xf32, #tpu.memory_space<vmem>>, vector<128x128xf32>
    %cst = arith.constant dense<0.000000e+00> : vector<64x128xf32>
    %6 = tpu.matmul %4, %5, %cst {dimension_numbers = #tpu.dot_dimension_numbers<[1], [0], [0], [1], [0, 0, 1, 1], [], []>} : vector<64x128xf32>, vector<128x128xf32>, vector<64x128xf32> -> vector<64x128xf32>
    %c0_5 = arith.constant 0 : index
    %c0_6 = arith.constant 0 : index
    %7 = vector.load %arg4[%c0_5, %c0_6] : memref<1x128xf32, #tpu.memory_space<vmem>>, vector<1x128xf32>
    %8 = vector.broadcast %7 : vector<1x128xf32> to vector<64x128xf32>
    %9 = arith.addf %6, %8 : vector<64x128xf32>
    %10 = vector.shape_cast %9 : vector<64x128xf32> to vector<8x8x128xf32>
    %c0_7 = arith.constant 0 : index
    %c0_8 = arith.constant 0 : index
    %c0_9 = arith.constant 0 : index
    %11 = vector.load %arg5[%c0_7, %c0_8, %c0_9] : memref<8x8x128xf32, #tpu.memory_space<vmem>>, vector<8x8x128xf32>
    tpu.vector_store %arg5[%c0_7, %c0_8, %c0_9], %10 {strides = array<i32>} : memref<8x8x128xf32, #tpu.memory_space<vmem>>, vector<8x8x128xf32>,
    %c0_10 = arith.constant 0 : index
    %c0_11 = arith.constant 0 : index
    %12 = vector.load %arg3[%c0_10, %c0_11] : memref<128x128xf32, #tpu.memory_space<vmem>>, vector<128x128xf32>
    %c0_12 = arith.constant 0 : index
    %c0_13 = arith.constant 0 : index
    %13 = vector.load %arg6[%c0_12, %c0_13] : memref<8x128xf32, #tpu.memory_space<vmem>>, vector<8x128xf32>
    %c0_i32_14 = arith.constant 0 : i32
    %14 = arith.index_cast %c0_i32_14 : i32 to index
    %c0_15 = arith.constant 0 : index
    %c0_16 = arith.constant 0 : index
    %15 = vector.load %arg5[%14, %c0_15, %c0_16] : memref<8x8x128xf32, #tpu.memory_space<vmem>>, vector<1x8x128xf32>
    %16 = vector.shape_cast %15 : vector<1x8x128xf32> to vector<8x128xf32>
    %cst_17 = arith.constant dense<0.000000e+00> : vector<8x128xf32>
    %17 = tpu.matmul %13, %12, %cst_17 {dimension_numbers = #tpu.dot_dimension_numbers<[1], [0], [0], [1], [0, 0, 1, 1], [], []>} : vector<8x128xf32>, vector<128x128xf32>, vector<8x128xf32> -> vector<8x128xf32>
    %18 = arith.addf %16, %17 : vector<8x128xf32>
    %19 = math.tanh %18 : vector<8x128xf32>
    %20 = arith.index_cast %c0_i32_14 : i32 to index
    %c0_18 = arith.constant 0 : index
    %c0_19 = arith.constant 0 : index
    %21 = vector.load %arg5[%20, %c0_18, %c0_19] : memref<8x8x128xf32, #tpu.memory_space<vmem>>, vector<1x8x128xf32>
    %22 = vector.shape_cast %21 : vector<1x8x128xf32> to vector<8x128xf32>
    %23 = vector.shape_cast %19 : vector<8x128xf32> to vector<1x8x128xf32>
    tpu.vector_store %arg5[%20, %c0_18, %c0_19], %23 {strides = array<i32>} : memref<8x8x128xf32, #tpu.memory_space<vmem>>, vector<1x8x128xf32>,
    %c1_i32 = arith.constant 1 : i32
    %24 = arith.index_cast %c1_i32 : i32 to index
    %c0_20 = arith.constant 0 : index
    %c0_21 = arith.constant 0 : index
    %25 = vector.load %arg5[%24, %c0_20, %c0_21] : memref<8x8x128xf32, #tpu.memory_space<vmem>>, vector<1x8x128xf32>
    %26 = vector.shape_cast %25 : vector<1x8x128xf32> to vector<8x128xf32>
    %cst_22 = arith.constant dense<0.000000e+00> : vector<8x128xf32>
    %27 = tpu.matmul %19, %12, %cst_22 {dimension_numbers = #tpu.dot_dimension_numbers<[1], [0], [0], [1], [0, 0, 1, 1], [], []>} : vector<8x128xf32>, vector<128x128xf32>, vector<8x128xf32> -> vector<8x128xf32>
    %28 = arith.addf %26, %27 : vector<8x128xf32>
    %29 = math.tanh %28 : vector<8x128xf32>
    %30 = arith.index_cast %c1_i32 : i32 to index
    %c0_23 = arith.constant 0 : index
    %c0_24 = arith.constant 0 : index
    %31 = vector.load %arg5[%30, %c0_23, %c0_24] : memref<8x8x128xf32, #tpu.memory_space<vmem>>, vector<1x8x128xf32>
    %32 = vector.shape_cast %31 : vector<1x8x128xf32> to vector<8x128xf32>
    %33 = vector.shape_cast %29 : vector<8x128xf32> to vector<1x8x128xf32>
    tpu.vector_store %arg5[%30, %c0_23, %c0_24], %33 {strides = array<i32>} : memref<8x8x128xf32, #tpu.memory_space<vmem>>, vector<1x8x128xf32>,
    %c2_i32 = arith.constant 2 : i32
    %34 = arith.index_cast %c2_i32 : i32 to index
    %c0_25 = arith.constant 0 : index
    %c0_26 = arith.constant 0 : index
    %35 = vector.load %arg5[%34, %c0_25, %c0_26] : memref<8x8x128xf32, #tpu.memory_space<vmem>>, vector<1x8x128xf32>
    %36 = vector.shape_cast %35 : vector<1x8x128xf32> to vector<8x128xf32>
    %cst_27 = arith.constant dense<0.000000e+00> : vector<8x128xf32>
    %37 = tpu.matmul %29, %12, %cst_27 {dimension_numbers = #tpu.dot_dimension_numbers<[1], [0], [0], [1], [0, 0, 1, 1], [], []>} : vector<8x128xf32>, vector<128x128xf32>, vector<8x128xf32> -> vector<8x128xf32>
    %38 = arith.addf %36, %37 : vector<8x128xf32>
    %39 = math.tanh %38 : vector<8x128xf32>
    %40 = arith.index_cast %c2_i32 : i32 to index
    %c0_28 = arith.constant 0 : index
    %c0_29 = arith.constant 0 : index
    %41 = vector.load %arg5[%40, %c0_28, %c0_29] : memref<8x8x128xf32, #tpu.memory_space<vmem>>, vector<1x8x128xf32>
    %42 = vector.shape_cast %41 : vector<1x8x128xf32> to vector<8x128xf32>
    %43 = vector.shape_cast %39 : vector<8x128xf32> to vector<1x8x128xf32>
    tpu.vector_store %arg5[%40, %c0_28, %c0_29], %43 {strides = array<i32>} : memref<8x8x128xf32, #tpu.memory_space<vmem>>, vector<1x8x128xf32>,
    %c3_i32 = arith.constant 3 : i32
    %44 = arith.index_cast %c3_i32 : i32 to index
    %c0_30 = arith.constant 0 : index
    %c0_31 = arith.constant 0 : index
    %45 = vector.load %arg5[%44, %c0_30, %c0_31] : memref<8x8x128xf32, #tpu.memory_space<vmem>>, vector<1x8x128xf32>
    %46 = vector.shape_cast %45 : vector<1x8x128xf32> to vector<8x128xf32>
    %cst_32 = arith.constant dense<0.000000e+00> : vector<8x128xf32>
    %47 = tpu.matmul %39, %12, %cst_32 {dimension_numbers = #tpu.dot_dimension_numbers<[1], [0], [0], [1], [0, 0, 1, 1], [], []>} : vector<8x128xf32>, vector<128x128xf32>, vector<8x128xf32> -> vector<8x128xf32>
    %48 = arith.addf %46, %47 : vector<8x128xf32>
    %49 = math.tanh %48 : vector<8x128xf32>
    %50 = arith.index_cast %c3_i32 : i32 to index
    %c0_33 = arith.constant 0 : index
    %c0_34 = arith.constant 0 : index
    %51 = vector.load %arg5[%50, %c0_33, %c0_34] : memref<8x8x128xf32, #tpu.memory_space<vmem>>, vector<1x8x128xf32>
    %52 = vector.shape_cast %51 : vector<1x8x128xf32> to vector<8x128xf32>
    %53 = vector.shape_cast %49 : vector<8x128xf32> to vector<1x8x128xf32>
    tpu.vector_store %arg5[%50, %c0_33, %c0_34], %53 {strides = array<i32>} : memref<8x8x128xf32, #tpu.memory_space<vmem>>, vector<1x8x128xf32>,
    %c4_i32 = arith.constant 4 : i32
    %54 = arith.index_cast %c4_i32 : i32 to index
    %c0_35 = arith.constant 0 : index
    %c0_36 = arith.constant 0 : index
    %55 = vector.load %arg5[%54, %c0_35, %c0_36] : memref<8x8x128xf32, #tpu.memory_space<vmem>>, vector<1x8x128xf32>
    %56 = vector.shape_cast %55 : vector<1x8x128xf32> to vector<8x128xf32>
    %cst_37 = arith.constant dense<0.000000e+00> : vector<8x128xf32>
    %57 = tpu.matmul %49, %12, %cst_37 {dimension_numbers = #tpu.dot_dimension_numbers<[1], [0], [0], [1], [0, 0, 1, 1], [], []>} : vector<8x128xf32>, vector<128x128xf32>, vector<8x128xf32> -> vector<8x128xf32>
    %58 = arith.addf %56, %57 : vector<8x128xf32>
    %59 = math.tanh %58 : vector<8x128xf32>
    %60 = arith.index_cast %c4_i32 : i32 to index
    %c0_38 = arith.constant 0 : index
    %c0_39 = arith.constant 0 : index
    %61 = vector.load %arg5[%60, %c0_38, %c0_39] : memref<8x8x128xf32, #tpu.memory_space<vmem>>, vector<1x8x128xf32>
    %62 = vector.shape_cast %61 : vector<1x8x128xf32> to vector<8x128xf32>
    %63 = vector.shape_cast %59 : vector<8x128xf32> to vector<1x8x128xf32>
    tpu.vector_store %arg5[%60, %c0_38, %c0_39], %63 {strides = array<i32>} : memref<8x8x128xf32, #tpu.memory_space<vmem>>, vector<1x8x128xf32>,
    %c5_i32 = arith.constant 5 : i32
    %64 = arith.index_cast %c5_i32 : i32 to index
    %c0_40 = arith.constant 0 : index
    %c0_41 = arith.constant 0 : index
    %65 = vector.load %arg5[%64, %c0_40, %c0_41] : memref<8x8x128xf32, #tpu.memory_space<vmem>>, vector<1x8x128xf32>
    %66 = vector.shape_cast %65 : vector<1x8x128xf32> to vector<8x128xf32>
    %cst_42 = arith.constant dense<0.000000e+00> : vector<8x128xf32>
    %67 = tpu.matmul %59, %12, %cst_42 {dimension_numbers = #tpu.dot_dimension_numbers<[1], [0], [0], [1], [0, 0, 1, 1], [], []>} : vector<8x128xf32>, vector<128x128xf32>, vector<8x128xf32> -> vector<8x128xf32>
    %68 = arith.addf %66, %67 : vector<8x128xf32>
    %69 = math.tanh %68 : vector<8x128xf32>
    %70 = arith.index_cast %c5_i32 : i32 to index
    %c0_43 = arith.constant 0 : index
    %c0_44 = arith.constant 0 : index
    %71 = vector.load %arg5[%70, %c0_43, %c0_44] : memref<8x8x128xf32, #tpu.memory_space<vmem>>, vector<1x8x128xf32>
    %72 = vector.shape_cast %71 : vector<1x8x128xf32> to vector<8x128xf32>
    %73 = vector.shape_cast %69 : vector<8x128xf32> to vector<1x8x128xf32>
    tpu.vector_store %arg5[%70, %c0_43, %c0_44], %73 {strides = array<i32>} : memref<8x8x128xf32, #tpu.memory_space<vmem>>, vector<1x8x128xf32>,
    %c6_i32 = arith.constant 6 : i32
    %74 = arith.index_cast %c6_i32 : i32 to index
    %c0_45 = arith.constant 0 : index
    %c0_46 = arith.constant 0 : index
    %75 = vector.load %arg5[%74, %c0_45, %c0_46] : memref<8x8x128xf32, #tpu.memory_space<vmem>>, vector<1x8x128xf32>
    %76 = vector.shape_cast %75 : vector<1x8x128xf32> to vector<8x128xf32>
    %cst_47 = arith.constant dense<0.000000e+00> : vector<8x128xf32>
    %77 = tpu.matmul %69, %12, %cst_47 {dimension_numbers = #tpu.dot_dimension_numbers<[1], [0], [0], [1], [0, 0, 1, 1], [], []>} : vector<8x128xf32>, vector<128x128xf32>, vector<8x128xf32> -> vector<8x128xf32>
    %78 = arith.addf %76, %77 : vector<8x128xf32>
    %79 = math.tanh %78 : vector<8x128xf32>
    %80 = arith.index_cast %c6_i32 : i32 to index
    %c0_48 = arith.constant 0 : index
    %c0_49 = arith.constant 0 : index
    %81 = vector.load %arg5[%80, %c0_48, %c0_49] : memref<8x8x128xf32, #tpu.memory_space<vmem>>, vector<1x8x128xf32>
    %82 = vector.shape_cast %81 : vector<1x8x128xf32> to vector<8x128xf32>
    %83 = vector.shape_cast %79 : vector<8x128xf32> to vector<1x8x128xf32>
    tpu.vector_store %arg5[%80, %c0_48, %c0_49], %83 {strides = array<i32>} : memref<8x8x128xf32, #tpu.memory_space<vmem>>, vector<1x8x128xf32>,
    %c7_i32 = arith.constant 7 : i32
    %84 = arith.index_cast %c7_i32 : i32 to index
    %c0_50 = arith.constant 0 : index
    %c0_51 = arith.constant 0 : index
    %85 = vector.load %arg5[%84, %c0_50, %c0_51] : memref<8x8x128xf32, #tpu.memory_space<vmem>>, vector<1x8x128xf32>
    %86 = vector.shape_cast %85 : vector<1x8x128xf32> to vector<8x128xf32>
    %cst_52 = arith.constant dense<0.000000e+00> : vector<8x128xf32>
    %87 = tpu.matmul %79, %12, %cst_52 {dimension_numbers = #tpu.dot_dimension_numbers<[1], [0], [0], [1], [0, 0, 1, 1], [], []>} : vector<8x128xf32>, vector<128x128xf32>, vector<8x128xf32> -> vector<8x128xf32>
    %88 = arith.addf %86, %87 : vector<8x128xf32>
    %89 = math.tanh %88 : vector<8x128xf32>
    %90 = arith.index_cast %c7_i32 : i32 to index
    %c0_53 = arith.constant 0 : index
    %c0_54 = arith.constant 0 : index
    %91 = vector.load %arg5[%90, %c0_53, %c0_54] : memref<8x8x128xf32, #tpu.memory_space<vmem>>, vector<1x8x128xf32>
    %92 = vector.shape_cast %91 : vector<1x8x128xf32> to vector<8x128xf32>
    %93 = vector.shape_cast %89 : vector<8x128xf32> to vector<1x8x128xf32>
    tpu.vector_store %arg5[%90, %c0_53, %c0_54], %93 {strides = array<i32>} : memref<8x8x128xf32, #tpu.memory_space<vmem>>, vector<1x8x128xf32>,
    %c8_i32 = arith.constant 8 : i32
    %c0_55 = arith.constant 0 : index
    %c0_56 = arith.constant 0 : index
    %94 = vector.load %arg6[%c0_55, %c0_56] : memref<8x128xf32, #tpu.memory_space<vmem>>, vector<8x128xf32>
    tpu.vector_store %arg6[%c0_55, %c0_56], %89 {strides = array<i32>} : memref<8x128xf32, #tpu.memory_space<vmem>>, vector<8x128xf32>,
    return
  }
  func.func @transform_0(%arg0: i32) -> (i32, i32, i32) {
    %c0_i32 = arith.constant 0 : i32
    %c0_i32_0 = arith.constant 0 : i32
    %c0_i32_1 = arith.constant 0 : i32
    return %arg0, %c0_i32, %c0_i32_0 : i32, i32, i32
  }
  func.func @transform_1(%arg0: i32) -> (i32, i32) {
    %c0_i32 = arith.constant 0 : i32
    %c0_i32_0 = arith.constant 0 : i32
    %c0_i32_1 = arith.constant 0 : i32
    return %c0_i32, %c0_i32_0 : i32, i32
  }
  func.func @transform_2(%arg0: i32) -> (i32, i32) {
    %c0_i32 = arith.constant 0 : i32
    %c0_i32_0 = arith.constant 0 : i32
    %c0_i32_1 = arith.constant 0 : i32
    return %c0_i32, %c0_i32_0 : i32, i32
  }
  func.func @transform_3(%arg0: i32) -> (i32, i32) {
    %c0_i32 = arith.constant 0 : i32
    %c0_i32_0 = arith.constant 0 : i32
    %c0_i32_1 = arith.constant 0 : i32
    return %c0_i32, %c0_i32_0 : i32, i32
  }
  func.func @transform_4(%arg0: i32) -> (i32, i32, i32) {
    %c0_i32 = arith.constant 0 : i32
    %c0_i32_0 = arith.constant 0 : i32
    %c0_i32_1 = arith.constant 0 : i32
    return %arg0, %c0_i32, %c0_i32_0 : i32, i32, i32
  }
}

</mosaic_0001>

<llo_original>
// kernel: _word_rnn_forward.1
$region0: #{_word_rnn_forward.1}
  #allocation0 [shape = 'u32[]', space=smem, size = 0x4, offset = 0x4, fixed_abs, tag = 'smem constant byte address 0x4 - core index']
  #allocation1 [shape = 'u32[144,128]{1,0:T(1,128)}', space=vmem, size = 0x12000, scoped, tag = 'internal scratch']
  #allocation2 [shape = 'f32[8,128]{1,0:T(8,128)}', space=vmem, size = 0x1000, scoped, tag = 'scratch operand']
  %s0 = inlined_call_operand.vmem [shape: f32[8,8,128], index: 0, kind: input, shape index: {}]
  %s1 = inlined_call_operand.vmem [shape: f32[128,128], index: 1, kind: input, shape index: {}]
  %s2 = inlined_call_operand.vmem [shape: f32[128,128], index: 2, kind: input, shape index: {}]
  %s3 = inlined_call_operand.vmem [shape: f32[1,128], index: 3, kind: input, shape index: {}]
  %s4 = inlined_call_operand.vmem [shape: f32[8,8,128], index: 4, kind: output, shape index: {}]
  %s5 = sld [smem:[#allocation0]]
  $region30: #{_word_rnn_forward.1} parent=0
    _
  %s7 = ssub.s32 1, %s5
  %s8 = scalar_select 0, %s7, %s5
  // Predicated region
  $region2: #{_word_rnn_forward.1} parent=0 // pred_check
    _
  $region3: #{_word_rnn_forward.1} parent=0 // pred_check_branch
    %10 = sbr.rel (0) target = $region5
  $region4: #{_word_rnn_forward.1} parent=0 // pred_region
    _
  $region5: #{_word_rnn_forward.1} parent=0 // pred_fallthru
    _
  // Predicated region
  $region6: #{_word_rnn_forward.1} parent=0 // pred_check
    _
  $region7: #{_word_rnn_forward.1} parent=0 // pred_check_branch
    %12 = sbr.rel (0) target = $region9
  $region8: #{_word_rnn_forward.1} parent=0 // pred_region
    _
  $region9: #{_word_rnn_forward.1} parent=0 // pred_fallthru
    _
  // Predicated region
  $region10: #{_word_rnn_forward.1} parent=0 // pred_check
    _
  $region11: #{_word_rnn_forward.1} parent=0 // pred_check_branch
    %14 = sbr.rel (0) target = $region13
  $region12: #{_word_rnn_forward.1} parent=0 // pred_region
    _
  $region13: #{_word_rnn_forward.1} parent=0 // pred_fallthru
    _
  // Predicated region
  $region14: #{_word_rnn_forward.1} parent=0 // pred_check
    _
  $region15: #{_word_rnn_forward.1} parent=0 // pred_check_branch
    %16 = sbr.rel (0) target = $region17
  $region16: #{_word_rnn_forward.1} parent=0 // pred_region
    _
  $region17: #{_word_rnn_forward.1} parent=0 // pred_fallthru
    _
  %p17 = scmp.eq.s32.totalorder 0, 0
  // Predicated region
  $region18: #{_word_rnn_forward.1} parent=0 // pred_check
    %p18 = pneg %p17
  $region19: #{_word_rnn_forward.1} parent=0 // pred_check_branch
    %20 = sbr.rel (%p18) target = $region21
  $region20: #{_word_rnn_forward.1} parent=0 // pred_region
    %21 = vst [vmem:[#allocation2] sm:$0xff] 0.0
  $region21: #{_word_rnn_forward.1} parent=0 // pred_fallthru
    _
  %v22 = vld [vmem:[%s0] sm:$0xff]
  %v23 = vld [vmem:[%s0 + $0x8] sm:$0xff]
  %v24 = vld [vmem:[%s0 + $0x10] sm:$0xff]
  %v25 = vld [vmem:[%s0 + $0x18] sm:$0xff]
  %v26 = vld [vmem:[%s0 + $0x20] sm:$0xff]
  %v27 = vld [vmem:[%s0 + $0x28] sm:$0xff]
  %v28 = vld [vmem:[%s0 + $0x30] sm:$0xff]
  %v29 = vld [vmem:[%s0 + $0x38] sm:$0xff]
  %v30 = vld [vmem:[%s1] sm:$0xff]
  %v31 = vld [vmem:[%s1 + $0x8] sm:$0xff]
  %v32 = vld [vmem:[%s1 + $0x10] sm:$0xff]
  %v33 = vld [vmem:[%s1 + $0x18] sm:$0xff]
  %v34 = vld [vmem:[%s1 + $0x20] sm:$0xff]
  %v35 = vld [vmem:[%s1 + $0x28] sm:$0xff]
  %v36 = vld [vmem:[%s1 + $0x30] sm:$0xff]
  %v37 = vld [vmem:[%s1 + $0x38] sm:$0xff]
  %v38 = vld [vmem:[%s1 + $0x40] sm:$0xff]
  %v39 = vld [vmem:[%s1 + $0x48] sm:$0xff]
  %v40 = vld [vmem:[%s1 + $0x50] sm:$0xff]
  %v41 = vld [vmem:[%s1 + $0x58] sm:$0xff]
  %v42 = vld [vmem:[%s1 + $0x60] sm:$0xff]
  %v43 = vld [vmem:[%s1 + $0x68] sm:$0xff]
  %v44 = vld [vmem:[%s1 + $0x70] sm:$0xff]
  %v45 = vld [vmem:[%s1 + $0x78] sm:$0xff]
  %v46 = vld [vmem:[%s3] sm:$0x1]
  %v48 = vlaneseq
  %v49 = vshrl.u32 %v48, 7
  %v50 = vsub.s32 0, %v49
  %v51 = vrot.slane %v46, %v50
  %53 = vmatprep.subr.mxu0 0.0
  %54 = vmatpush1.msra.mxu0 %v45
  %55 = vmatprep.subr.mxu0 0.0
  %56 = vmatpush1.msra.mxu0 %v44
  %57 = vmatprep.subr.mxu0 0.0
  %58 = vmatpush1.msra.mxu0 %v43
  %59 = vmatprep.subr.mxu0 0.0
  %60 = vmatpush1.msra.mxu0 %v42
  %61 = vmatprep.subr.mxu0 0.0
  %62 = vmatpush1.msra.mxu0 %v41
  %63 = vmatprep.subr.mxu0 0.0
  %64 = vmatpush1.msra.mxu0 %v40
  %65 = vmatprep.subr.mxu0 0.0
  %66 = vmatpush1.msra.mxu0 %v39
  %67 = vmatprep.subr.mxu0 0.0
  %68 = vmatpush1.msra.mxu0 %v38
  %69 = vmatprep.subr.mxu0 0.0
  %70 = vmatpush1.msra.mxu0 %v37
  %71 = vmatprep.subr.mxu0 0.0
  %72 = vmatpush1.msra.mxu0 %v36
  %73 = vmatprep.subr.mxu0 0.0
  %74 = vmatpush1.msra.mxu0 %v35
  %75 = vmatprep.subr.mxu0 0.0
  %76 = vmatpush1.msra.mxu0 %v34
  %77 = vmatprep.subr.mxu0 0.0
  %78 = vmatpush1.msra.mxu0 %v33
  %79 = vmatprep.subr.mxu0 0.0
  %80 = vmatpush1.msra.mxu0 %v32
  %81 = vmatprep.subr.mxu0 0.0
  %82 = vmatpush1.msra.mxu0 %v31
  %83 = vmatprep.subr.mxu0 0.0
  %84 = vmatpush1.msra.mxu0 %v30
  %85 = vmatprep.subr.mxu0 0.0
  %86 = vmatpush2.msra.mxu0 0.0
  %87 = vmatprep.subr.mxu0 0.0
  %88 = vmatpush2.msra.mxu0 0.0
  %89 = vmatprep.subr.mxu0 0.0
  %90 = vmatpush2.msra.mxu0 0.0
  %91 = vmatprep.subr.mxu0 0.0
  %92 = vmatpush2.msra.mxu0 0.0
  %93 = vmatprep.subr.mxu0 0.0
  %94 = vmatpush2.msra.mxu0 0.0
  %95 = vmatprep.subr.mxu0 0.0
  %96 = vmatpush2.msra.mxu0 0.0
  %97 = vmatprep.subr.mxu0 0.0
  %98 = vmatpush2.msra.mxu0 0.0
  %99 = vmatprep.subr.mxu0 0.0
  %100 = vmatpush2.msra.mxu0 0.0
  %101 = vmatprep.subr.mxu0 0.0
  %102 = vmatpush2.msra.mxu0 0.0
  %103 = vmatprep.subr.mxu0 0.0
  %104 = vmatpush2.msra.mxu0 0.0
  %105 = vmatprep.subr.mxu0 0.0
  %106 = vmatpush2.msra.mxu0 0.0
  %107 = vmatprep.subr.mxu0 0.0
  %108 = vmatpush2.msra.mxu0 0.0
  %109 = vmatprep.subr.mxu0 0.0
  %110 = vmatpush2.msra.mxu0 0.0
  %111 = vmatprep.subr.mxu0 0.0
  %112 = vmatpush2.msra.mxu0 0.0
  %113 = vmatprep.subr.mxu0 0.0
  %114 = vmatpush2.msra.mxu0 0.0
  %115 = vmatprep.subr.mxu0 0.0
  %116 = vmatpush2.msra.mxu0 0.0
  %117 = vmatprep.mubr.f32.mxu0 0.0
  %118 = vmatmul.mubr.f32.gmra.mxu0 %v22
  %v119 = vpop.f32.mrf.mxu0
  %v120 = vadd.f32 %v51, %v119
  %v121 = vpop.f32.mrf.mxu0
  %122 = vmatprep.mubr.f32.mxu0 0.0
  %123 = vmatmul.mubr.f32.gmra.mxu0 %v23
  %v124 = vpop.f32.mrf.mxu0
  %v125 = vadd.f32 %v51, %v124
  %v126 = vpop.f32.mrf.mxu0
  %127 = vmatprep.mubr.f32.mxu0 0.0
  %128 = vmatmul.mubr.f32.gmra.mxu0 %v24
  %v129 = vpop.f32.mrf.mxu0
  %v130 = vadd.f32 %v51, %v129
  %v131 = vpop.f32.mrf.mxu0
  %132 = vmatprep.mubr.f32.mxu0 0.0
  %133 = vmatmul.mubr.f32.gmra.mxu0 %v25
  %v134 = vpop.f32.mrf.mxu0
  %v135 = vadd.f32 %v51, %v134
  %v136 = vpop.f32.mrf.mxu0
  %137 = vmatprep.mubr.f32.mxu0 0.0
  %138 = vmatmul.mubr.f32.gmra.mxu0 %v26
  %v139 = vpop.f32.mrf.mxu0
  %v140 = vadd.f32 %v51, %v139
  %v141 = vpop.f32.mrf.mxu0
  %142 = vmatprep.mubr.f32.mxu0 0.0
  %143 = vmatmul.mubr.f32.gmra.mxu0 %v27
  %v144 = vpop.f32.mrf.mxu0
  %v145 = vadd.f32 %v51, %v144
  %v146 = vpop.f32.mrf.mxu0
  %147 = vmatprep.mubr.f32.mxu0 0.0
  %148 = vmatmul.mubr.f32.gmra.mxu0 %v28
  %v149 = vpop.f32.mrf.mxu0
  %v150 = vadd.f32 %v51, %v149
  %v151 = vpop.f32.mrf.mxu0
  %152 = vmatprep.mubr.f32.mxu0 0.0
  %153 = vmatmul.mubr.f32.gmra.mxu0 %v29
  %v154 = vpop.f32.mrf.mxu0
  %v155 = vadd.f32 %v51, %v154
  %v156 = vpop.f32.mrf.mxu0
  %157 = vdwg.mxu0
  %158 = vst [vmem:[%s4] sm:$0xff] %v120
  %159 = vst [vmem:[%s4 + $0x8] sm:$0xff] %v125
  %160 = vst [vmem:[%s4 + $0x10] sm:$0xff] %v130
  %161 = vst [vmem:[%s4 + $0x18] sm:$0xff] %v135
  %162 = vst [vmem:[%s4 + $0x20] sm:$0xff] %v140
  %163 = vst [vmem:[%s4 + $0x28] sm:$0xff] %v145
  %164 = vst [vmem:[%s4 + $0x30] sm:$0xff] %v150
  %165 = vst [vmem:[%s4 + $0x38] sm:$0xff] %v155
  %v166 = vld [vmem:[%s2] sm:$0xff]
  %v167 = vld [vmem:[%s2 + $0x8] sm:$0xff]
  %v168 = vld [vmem:[%s2 + $0x10] sm:$0xff]
  %v169 = vld [vmem:[%s2 + $0x18] sm:$0xff]
  %v170 = vld [vmem:[%s2 + $0x20] sm:$0xff]
  %v171 = vld [vmem:[%s2 + $0x28] sm:$0xff]
  %v172 = vld [vmem:[%s2 + $0x30] sm:$0xff]
  %v173 = vld [vmem:[%s2 + $0x38] sm:$0xff]
  %v174 = vld [vmem:[%s2 + $0x40] sm:$0xff]
  %v175 = vld [vmem:[%s2 + $0x48] sm:$0xff]
  %v176 = vld [vmem:[%s2 + $0x50] sm:$0xff]
  %v177 = vld [vmem:[%s2 + $0x58] sm:$0xff]
  %v178 = vld [vmem:[%s2 + $0x60] sm:$0xff]
  %v179 = vld [vmem:[%s2 + $0x68] sm:$0xff]
  %v180 = vld [vmem:[%s2 + $0x70] sm:$0xff]
  %v181 = vld [vmem:[%s2 + $0x78] sm:$0xff]
  %v182 = vld [vmem:[#allocation2] sm:$0xff]
  %v183 = vld [vmem:[%s4] sm:$0xff]
  %184 = vmatprep.subr.mxu0 0.0
  %185 = vmatpush1.msra.mxu0 %v181
  %186 = vmatprep.subr.mxu0 0.0
  %187 = vmatpush1.msra.mxu0 %v180
  %188 = vmatprep.subr.mxu0 0.0
  %189 = vmatpush1.msra.mxu0 %v179
  %190 = vmatprep.subr.mxu0 0.0
  %191 = vmatpush1.msra.mxu0 %v178
  %192 = vmatprep.subr.mxu0 0.0
  %193 = vmatpush1.msra.mxu0 %v177
  %194 = vmatprep.subr.mxu0 0.0
  %195 = vmatpush1.msra.mxu0 %v176
  %196 = vmatprep.subr.mxu0 0.0
  %197 = vmatpush1.msra.mxu0 %v175
  %198 = vmatprep.subr.mxu0 0.0
  %199 = vmatpush1.msra.mxu0 %v174
  %200 = vmatprep.subr.mxu0 0.0
  %201 = vmatpush1.msra.mxu0 %v173
  %202 = vmatprep.subr.mxu0 0.0
  %203 = vmatpush1.msra.mxu0 %v172
  %204 = vmatprep.subr.mxu0 0.0
  %205 = vmatpush1.msra.mxu0 %v171
  %206 = vmatprep.subr.mxu0 0.0
  %207 = vmatpush1.msra.mxu0 %v170
  %208 = vmatprep.subr.mxu0 0.0
  %209 = vmatpush1.msra.mxu0 %v169
  %210 = vmatprep.subr.mxu0 0.0
  %211 = vmatpush1.msra.mxu0 %v168
  %212 = vmatprep.subr.mxu0 0.0
  %213 = vmatpush1.msra.mxu0 %v167
  %214 = vmatprep.subr.mxu0 0.0
  %215 = vmatpush1.msra.mxu0 %v166
  %216 = vmatprep.subr.mxu0 0.0
  %217 = vmatpush2.msra.mxu0 0.0
  %218 = vmatprep.subr.mxu0 0.0
  %219 = vmatpush2.msra.mxu0 0.0
  %220 = vmatprep.subr.mxu0 0.0
  %221 = vmatpush2.msra.mxu0 0.0
  %222 = vmatprep.subr.mxu0 0.0
  %223 = vmatpush2.msra.mxu0 0.0
  %224 = vmatprep.subr.mxu0 0.0
  %225 = vmatpush2.msra.mxu0 0.0
  %226 = vmatprep.subr.mxu0 0.0
  %227 = vmatpush2.msra.mxu0 0.0
  %228 = vmatprep.subr.mxu0 0.0
  %229 = vmatpush2.msra.mxu0 0.0
  %230 = vmatprep.subr.mxu0 0.0
  %231 = vmatpush2.msra.mxu0 0.0
  %232 = vmatprep.subr.mxu0 0.0
  %233 = vmatpush2.msra.mxu0 0.0
  %234 = vmatprep.subr.mxu0 0.0
  %235 = vmatpush2.msra.mxu0 0.0
  %236 = vmatprep.subr.mxu0 0.0
  %237 = vmatpush2.msra.mxu0 0.0
  %238 = vmatprep.subr.mxu0 0.0
  %239 = vmatpush2.msra.mxu0 0.0
  %240 = vmatprep.subr.mxu0 0.0
  %241 = vmatpush2.msra.mxu0 0.0
  %242 = vmatprep.subr.mxu0 0.0
  %243 = vmatpush2.msra.mxu0 0.0
  %244 = vmatprep.subr.mxu0 0.0
  %245 = vmatpush2.msra.mxu0 0.0
  %246 = vmatprep.subr.mxu0 0.0
  %247 = vmatpush2.msra.mxu0 0.0
  %248 = vmatprep.mubr.f32.mxu0 0.0
  %249 = vmatmul.mubr.f32.gmra.mxu0 %v182
  %v250 = vpop.f32.mrf.mxu0
  %v251 = vadd.f32 0.0, %v250
  %v252 = vpop.f32.mrf.mxu0
  %253 = vdwg.mxu0
  %v254 = vadd.f32 %v183, %v251
  %v255 = vtanh.pop %v254
  %256 = vst [vmem:[%s4] sm:$0xff] %v255
  %s257 = scalar_lea.vmem %s4, 8
  %v258 = vld [vmem:[%s257] sm:$0xff]
  %259 = vmatprep.subr.mxu0 0.0
  %260 = vmatpush1.msra.mxu0 %v181
  %261 = vmatprep.subr.mxu0 0.0
  %262 = vmatpush1.msra.mxu0 %v180
  %263 = vmatprep.subr.mxu0 0.0
  %264 = vmatpush1.msra.mxu0 %v179
  %265 = vmatprep.subr.mxu0 0.0
  %266 = vmatpush1.msra.mxu0 %v178
  %267 = vmatprep.subr.mxu0 0.0
  %268 = vmatpush1.msra.mxu0 %v177
  %269 = vmatprep.subr.mxu0 0.0
  %270 = vmatpush1.msra.mxu0 %v176
  %271 = vmatprep.subr.mxu0 0.0
  %272 = vmatpush1.msra.mxu0 %v175
  %273 = vmatprep.subr.mxu0 0.0
  %274 = vmatpush1.msra.mxu0 %v174
  %275 = vmatprep.subr.mxu0 0.0
  %276 = vmatpush1.msra.mxu0 %v173
  %277 = vmatprep.subr.mxu0 0.0
  %278 = vmatpush1.msra.mxu0 %v172
  %279 = vmatprep.subr.mxu0 0.0
  %280 = vmatpush1.msra.mxu0 %v171
  %281 = vmatprep.subr.mxu0 0.0
  %282 = vmatpush1.msra.mxu0 %v170
  %283 = vmatprep.subr.mxu0 0.0
  %284 = vmatpush1.msra.mxu0 %v169
  %285 = vmatprep.subr.mxu0 0.0
  %286 = vmatpush1.msra.mxu0 %v168
  %287 = vmatprep.subr.mxu0 0.0
  %288 = vmatpush1.msra.mxu0 %v167
  %289 = vmatprep.subr.mxu0 0.0
  %290 = vmatpush1.msra.mxu0 %v166
  %291 = vmatprep.subr.mxu0 0.0
  %292 = vmatpush2.msra.mxu0 0.0
  %293 = vmatprep.subr.mxu0 0.0
  %294 = vmatpush2.msra.mxu0 0.0
  %295 = vmatprep.subr.mxu0 0.0
  %296 = vmatpush2.msra.mxu0 0.0
  %297 = vmatprep.subr.mxu0 0.0
  %298 = vmatpush2.msra.mxu0 0.0
  %299 = vmatprep.subr.mxu0 0.0
  %300 = vmatpush2.msra.mxu0 0.0
  %301 = vmatprep.subr.mxu0 0.0
  %302 = vmatpush2.msra.mxu0 0.0
  %303 = vmatprep.subr.mxu0 0.0
  %304 = vmatpush2.msra.mxu0 0.0
  %305 = vmatprep.subr.mxu0 0.0
  %306 = vmatpush2.msra.mxu0 0.0
  %307 = vmatprep.subr.mxu0 0.0
  %308 = vmatpush2.msra.mxu0 0.0
  %309 = vmatprep.subr.mxu0 0.0
  %310 = vmatpush2.msra.mxu0 0.0
  %311 = vmatprep.subr.mxu0 0.0
  %312 = vmatpush2.msra.mxu0 0.0
  %313 = vmatprep.subr.mxu0 0.0
  %314 = vmatpush2.msra.mxu0 0.0
  %315 = vmatprep.subr.mxu0 0.0
  %316 = vmatpush2.msra.mxu0 0.0
  %317 = vmatprep.subr.mxu0 0.0
  %318 = vmatpush2.msra.mxu0 0.0
  %319 = vmatprep.subr.mxu0 0.0
  %320 = vmatpush2.msra.mxu0 0.0
  %321 = vmatprep.subr.mxu0 0.0
  %322 = vmatpush2.msra.mxu0 0.0
  %323 = vmatprep.mubr.f32.mxu0 0.0
  %324 = vmatmul.mubr.f32.gmra.mxu0 %v255
  %v325 = vpop.f32.mrf.mxu0
  %v326 = vadd.f32 0.0, %v325
  %v327 = vpop.f32.mrf.mxu0
  %328 = vdwg.mxu0
  %v329 = vadd.f32 %v258, %v326
  %v330 = vtanh.pop %v329
  %331 = vst [vmem:[%s257] sm:$0xff] %v330
  %s332 = scalar_lea.vmem %s4, 16
  %v333 = vld [vmem:[%s332] sm:$0xff]
  %334 = vmatprep.subr.mxu0 0.0
  %335 = vmatpush1.msra.mxu0 %v181
  %336 = vmatprep.subr.mxu0 0.0
  %337 = vmatpush1.msra.mxu0 %v180
  %338 = vmatprep.subr.mxu0 0.0
  %339 = vmatpush1.msra.mxu0 %v179
  %340 = vmatprep.subr.mxu0 0.0
  %341 = vmatpush1.msra.mxu0 %v178
  %342 = vmatprep.subr.mxu0 0.0
  %343 = vmatpush1.msra.mxu0 %v177
  %344 = vmatprep.subr.mxu0 0.0
  %345 = vmatpush1.msra.mxu0 %v176
  %346 = vmatprep.subr.mxu0 0.0
  %347 = vmatpush1.msra.mxu0 %v175
  %348 = vmatprep.subr.mxu0 0.0
  %349 = vmatpush1.msra.mxu0 %v174
  %350 = vmatprep.subr.mxu0 0.0
  %351 = vmatpush1.msra.mxu0 %v173
  %352 = vmatprep.subr.mxu0 0.0
  %353 = vmatpush1.msra.mxu0 %v172
  %354 = vmatprep.subr.mxu0 0.0
  %355 = vmatpush1.msra.mxu0 %v171
  %356 = vmatprep.subr.mxu0 0.0
  %357 = vmatpush1.msra.mxu0 %v170
  %358 = vmatprep.subr.mxu0 0.0
  %359 = vmatpush1.msra.mxu0 %v169
  %360 = vmatprep.subr.mxu0 0.0
  %361 = vmatpush1.msra.mxu0 %v168
  %362 = vmatprep.subr.mxu0 0.0
  %363 = vmatpush1.msra.mxu0 %v167
  %364 = vmatprep.subr.mxu0 0.0
  %365 = vmatpush1.msra.mxu0 %v166
  %366 = vmatprep.subr.mxu0 0.0
  %367 = vmatpush2.msra.mxu0 0.0
  %368 = vmatprep.subr.mxu0 0.0
  %369 = vmatpush2.msra.mxu0 0.0
  %370 = vmatprep.subr.mxu0 0.0
  %371 = vmatpush2.msra.mxu0 0.0
  %372 = vmatprep.subr.mxu0 0.0
  %373 = vmatpush2.msra.mxu0 0.0
  %374 = vmatprep.subr.mxu0 0.0
  %375 = vmatpush2.msra.mxu0 0.0
  %376 = vmatprep.subr.mxu0 0.0
  %377 = vmatpush2.msra.mxu0 0.0
  %378 = vmatprep.subr.mxu0 0.0
  %379 = vmatpush2.msra.mxu0 0.0
  %380 = vmatprep.subr.mxu0 0.0
  %381 = vmatpush2.msra.mxu0 0.0
  %382 = vmatprep.subr.mxu0 0.0
  %383 = vmatpush2.msra.mxu0 0.0
  %384 = vmatprep.subr.mxu0 0.0
  %385 = vmatpush2.msra.mxu0 0.0
  %386 = vmatprep.subr.mxu0 0.0
  %387 = vmatpush2.msra.mxu0 0.0
  %388 = vmatprep.subr.mxu0 0.0
  %389 = vmatpush2.msra.mxu0 0.0
  %390 = vmatprep.subr.mxu0 0.0
  %391 = vmatpush2.msra.mxu0 0.0
  %392 = vmatprep.subr.mxu0 0.0
  %393 = vmatpush2.msra.mxu0 0.0
  %394 = vmatprep.subr.mxu0 0.0
  %395 = vmatpush2.msra.mxu0 0.0
  %396 = vmatprep.subr.mxu0 0.0
  %397 = vmatpush2.msra.mxu0 0.0
  %398 = vmatprep.mubr.f32.mxu0 0.0
  %399 = vmatmul.mubr.f32.gmra.mxu0 %v330
  %v400 = vpop.f32.mrf.mxu0
  %v401 = vadd.f32 0.0, %v400
  %v402 = vpop.f32.mrf.mxu0
  %403 = vdwg.mxu0
  %v404 = vadd.f32 %v333, %v401
  %v405 = vtanh.pop %v404
  %406 = vst [vmem:[%s332] sm:$0xff] %v405
  %s407 = scalar_lea.vmem %s4, 24
  %v408 = vld [vmem:[%s407] sm:$0xff]
  %409 = vmatprep.subr.mxu0 0.0
  %410 = vmatpush1.msra.mxu0 %v181
  %411 = vmatprep.subr.mxu0 0.0
  %412 = vmatpush1.msra.mxu0 %v180
  %413 = vmatprep.subr.mxu0 0.0
  %414 = vmatpush1.msra.mxu0 %v179
  %415 = vmatprep.subr.mxu0 0.0
  %416 = vmatpush1.msra.mxu0 %v178
  %417 = vmatprep.subr.mxu0 0.0
  %418 = vmatpush1.msra.mxu0 %v177
  %419 = vmatprep.subr.mxu0 0.0
  %420 = vmatpush1.msra.mxu0 %v176
  %421 = vmatprep.subr.mxu0 0.0
  %422 = vmatpush1.msra.mxu0 %v175
  %423 = vmatprep.subr.mxu0 0.0
  %424 = vmatpush1.msra.mxu0 %v174
  %425 = vmatprep.subr.mxu0 0.0
  %426 = vmatpush1.msra.mxu0 %v173
  %427 = vmatprep.subr.mxu0 0.0
  %428 = vmatpush1.msra.mxu0 %v172
  %429 = vmatprep.subr.mxu0 0.0
  %430 = vmatpush1.msra.mxu0 %v171
  %431 = vmatprep.subr.mxu0 0.0
  %432 = vmatpush1.msra.mxu0 %v170
  %433 = vmatprep.subr.mxu0 0.0
  %434 = vmatpush1.msra.mxu0 %v169
  %435 = vmatprep.subr.mxu0 0.0
  %436 = vmatpush1.msra.mxu0 %v168
  %437 = vmatprep.subr.mxu0 0.0
  %438 = vmatpush1.msra.mxu0 %v167
  %439 = vmatprep.subr.mxu0 0.0
  %440 = vmatpush1.msra.mxu0 %v166
  %441 = vmatprep.subr.mxu0 0.0
  %442 = vmatpush2.msra.mxu0 0.0
  %443 = vmatprep.subr.mxu0 0.0
  %444 = vmatpush2.msra.mxu0 0.0
  %445 = vmatprep.subr.mxu0 0.0
  %446 = vmatpush2.msra.mxu0 0.0
  %447 = vmatprep.subr.mxu0 0.0
  %448 = vmatpush2.msra.mxu0 0.0
  %449 = vmatprep.subr.mxu0 0.0
  %450 = vmatpush2.msra.mxu0 0.0
  %451 = vmatprep.subr.mxu0 0.0
  %452 = vmatpush2.msra.mxu0 0.0
  %453 = vmatprep.subr.mxu0 0.0
  %454 = vmatpush2.msra.mxu0 0.0
  %455 = vmatprep.subr.mxu0 0.0
  %456 = vmatpush2.msra.mxu0 0.0
  %457 = vmatprep.subr.mxu0 0.0
  %458 = vmatpush2.msra.mxu0 0.0
  %459 = vmatprep.subr.mxu0 0.0
  %460 = vmatpush2.msra.mxu0 0.0
  %461 = vmatprep.subr.mxu0 0.0
  %462 = vmatpush2.msra.mxu0 0.0
  %463 = vmatprep.subr.mxu0 0.0
  %464 = vmatpush2.msra.mxu0 0.0
  %465 = vmatprep.subr.mxu0 0.0
  %466 = vmatpush2.msra.mxu0 0.0
  %467 = vmatprep.subr.mxu0 0.0
  %468 = vmatpush2.msra.mxu0 0.0
  %469 = vmatprep.subr.mxu0 0.0
  %470 = vmatpush2.msra.mxu0 0.0
  %471 = vmatprep.subr.mxu0 0.0
  %472 = vmatpush2.msra.mxu0 0.0
  %473 = vmatprep.mubr.f32.mxu0 0.0
  %474 = vmatmul.mubr.f32.gmra.mxu0 %v405
  %v475 = vpop.f32.mrf.mxu0
  %v476 = vadd.f32 0.0, %v475
  %v477 = vpop.f32.mrf.mxu0
  %478 = vdwg.mxu0
  %v479 = vadd.f32 %v408, %v476
  %v480 = vtanh.pop %v479
  %481 = vst [vmem:[%s407] sm:$0xff] %v480
  %s482 = scalar_lea.vmem %s4, 32
  %v483 = vld [vmem:[%s482] sm:$0xff]
  %484 = vmatprep.subr.mxu0 0.0
  %485 = vmatpush1.msra.mxu0 %v181
  %486 = vmatprep.subr.mxu0 0.0
  %487 = vmatpush1.msra.mxu0 %v180
  %488 = vmatprep.subr.mxu0 0.0
  %489 = vmatpush1.msra.mxu0 %v179
  %490 = vmatprep.subr.mxu0 0.0
  %491 = vmatpush1.msra.mxu0 %v178
  %492 = vmatprep.subr.mxu0 0.0
  %493 = vmatpush1.msra.mxu0 %v177
  %494 = vmatprep.subr.mxu0 0.0
  %495 = vmatpush1.msra.mxu0 %v176
  %496 = vmatprep.subr.mxu0 0.0
  %497 = vmatpush1.msra.mxu0 %v175
  %498 = vmatprep.subr.mxu0 0.0
  %499 = vmatpush1.msra.mxu0 %v174
  %500 = vmatprep.subr.mxu0 0.0
  %501 = vmatpush1.msra.mxu0 %v173
  %502 = vmatprep.subr.mxu0 0.0
  %503 = vmatpush1.msra.mxu0 %v172
  %504 = vmatprep.subr.mxu0 0.0
  %505 = vmatpush1.msra.mxu0 %v171
  %506 = vmatprep.subr.mxu0 0.0
  %507 = vmatpush1.msra.mxu0 %v170
  %508 = vmatprep.subr.mxu0 0.0
  %509 = vmatpush1.msra.mxu0 %v169
  %510 = vmatprep.subr.mxu0 0.0
  %511 = vmatpush1.msra.mxu0 %v168
  %512 = vmatprep.subr.mxu0 0.0
  %513 = vmatpush1.msra.mxu0 %v167
  %514 = vmatprep.subr.mxu0 0.0
  %515 = vmatpush1.msra.mxu0 %v166
  %516 = vmatprep.subr.mxu0 0.0
  %517 = vmatpush2.msra.mxu0 0.0
  %518 = vmatprep.subr.mxu0 0.0
  %519 = vmatpush2.msra.mxu0 0.0
  %520 = vmatprep.subr.mxu0 0.0
  %521 = vmatpush2.msra.mxu0 0.0
  %522 = vmatprep.subr.mxu0 0.0
  %523 = vmatpush2.msra.mxu0 0.0
  %524 = vmatprep.subr.mxu0 0.0
  %525 = vmatpush2.msra.mxu0 0.0
  %526 = vmatprep.subr.mxu0 0.0
  %527 = vmatpush2.msra.mxu0 0.0
  %528 = vmatprep.subr.mxu0 0.0
  %529 = vmatpush2.msra.mxu0 0.0
  %530 = vmatprep.subr.mxu0 0.0
  %531 = vmatpush2.msra.mxu0 0.0
  %532 = vmatprep.subr.mxu0 0.0
  %533 = vmatpush2.msra.mxu0 0.0
  %534 = vmatprep.subr.mxu0 0.0
  %535 = vmatpush2.msra.mxu0 0.0
  %536 = vmatprep.subr.mxu0 0.0
  %537 = vmatpush2.msra.mxu0 0.0
  %538 = vmatprep.subr.mxu0 0.0
  %539 = vmatpush2.msra.mxu0 0.0
  %540 = vmatprep.subr.mxu0 0.0
  %541 = vmatpush2.msra.mxu0 0.0
  %542 = vmatprep.subr.mxu0 0.0
  %543 = vmatpush2.msra.mxu0 0.0
  %544 = vmatprep.subr.mxu0 0.0
  %545 = vmatpush2.msra.mxu0 0.0
  %546 = vmatprep.subr.mxu0 0.0
  %547 = vmatpush2.msra.mxu0 0.0
  %548 = vmatprep.mubr.f32.mxu0 0.0
  %549 = vmatmul.mubr.f32.gmra.mxu0 %v480
  %v550 = vpop.f32.mrf.mxu0
  %v551 = vadd.f32 0.0, %v550
  %v552 = vpop.f32.mrf.mxu0
  %553 = vdwg.mxu0
  %v554 = vadd.f32 %v483, %v551
  %v555 = vtanh.pop %v554
  %556 = vst [vmem:[%s482] sm:$0xff] %v555
  %s557 = scalar_lea.vmem %s4, 40
  %v558 = vld [vmem:[%s557] sm:$0xff]
  %559 = vmatprep.subr.mxu0 0.0
  %560 = vmatpush1.msra.mxu0 %v181
  %561 = vmatprep.subr.mxu0 0.0
  %562 = vmatpush1.msra.mxu0 %v180
  %563 = vmatprep.subr.mxu0 0.0
  %564 = vmatpush1.msra.mxu0 %v179
  %565 = vmatprep.subr.mxu0 0.0
  %566 = vmatpush1.msra.mxu0 %v178
  %567 = vmatprep.subr.mxu0 0.0
  %568 = vmatpush1.msra.mxu0 %v177
  %569 = vmatprep.subr.mxu0 0.0
  %570 = vmatpush1.msra.mxu0 %v176
  %571 = vmatprep.subr.mxu0 0.0
  %572 = vmatpush1.msra.mxu0 %v175
  %573 = vmatprep.subr.mxu0 0.0
  %574 = vmatpush1.msra.mxu0 %v174
  %575 = vmatprep.subr.mxu0 0.0
  %576 = vmatpush1.msra.mxu0 %v173
  %577 = vmatprep.subr.mxu0 0.0
  %578 = vmatpush1.msra.mxu0 %v172
  %579 = vmatprep.subr.mxu0 0.0
  %580 = vmatpush1.msra.mxu0 %v171
  %581 = vmatprep.subr.mxu0 0.0
  %582 = vmatpush1.msra.mxu0 %v170
  %583 = vmatprep.subr.mxu0 0.0
  %584 = vmatpush1.msra.mxu0 %v169
  %585 = vmatprep.subr.mxu0 0.0
  %586 = vmatpush1.msra.mxu0 %v168
  %587 = vmatprep.subr.mxu0 0.0
  %588 = vmatpush1.msra.mxu0 %v167
  %589 = vmatprep.subr.mxu0 0.0
  %590 = vmatpush1.msra.mxu0 %v166
  %591 = vmatprep.subr.mxu0 0.0
  %592 = vmatpush2.msra.mxu0 0.0
  %593 = vmatprep.subr.mxu0 0.0
  %594 = vmatpush2.msra.mxu0 0.0
  %595 = vmatprep.subr.mxu0 0.0
  %596 = vmatpush2.msra.mxu0 0.0
  %597 = vmatprep.subr.mxu0 0.0
  %598 = vmatpush2.msra.mxu0 0.0
  %599 = vmatprep.subr.mxu0 0.0
  %600 = vmatpush2.msra.mxu0 0.0
  %601 = vmatprep.subr.mxu0 0.0
  %602 = vmatpush2.msra.mxu0 0.0
  %603 = vmatprep.subr.mxu0 0.0
  %604 = vmatpush2.msra.mxu0 0.0
  %605 = vmatprep.subr.mxu0 0.0
  %606 = vmatpush2.msra.mxu0 0.0
  %607 = vmatprep.subr.mxu0 0.0
  %608 = vmatpush2.msra.mxu0 0.0
  %609 = vmatprep.subr.mxu0 0.0
  %610 = vmatpush2.msra.mxu0 0.0
  %611 = vmatprep.subr.mxu0 0.0
  %612 = vmatpush2.msra.mxu0 0.0
  %613 = vmatprep.subr.mxu0 0.0
  %614 = vmatpush2.msra.mxu0 0.0
  %615 = vmatprep.subr.mxu0 0.0
  %616 = vmatpush2.msra.mxu0 0.0
  %617 = vmatprep.subr.mxu0 0.0
  %618 = vmatpush2.msra.mxu0 0.0
  %619 = vmatprep.subr.mxu0 0.0
  %620 = vmatpush2.msra.mxu0 0.0
  %621 = vmatprep.subr.mxu0 0.0
  %622 = vmatpush2.msra.mxu0 0.0
  %623 = vmatprep.mubr.f32.mxu0 0.0
  %624 = vmatmul.mubr.f32.gmra.mxu0 %v555
  %v625 = vpop.f32.mrf.mxu0
  %v626 = vadd.f32 0.0, %v625
  %v627 = vpop.f32.mrf.mxu0
  %628 = vdwg.mxu0
  %v629 = vadd.f32 %v558, %v626
  %v630 = vtanh.pop %v629
  %631 = vst [vmem:[%s557] sm:$0xff] %v630
  %s632 = scalar_lea.vmem %s4, 48
  %v633 = vld [vmem:[%s632] sm:$0xff]
  %634 = vmatprep.subr.mxu0 0.0
  %635 = vmatpush1.msra.mxu0 %v181
  %636 = vmatprep.subr.mxu0 0.0
  %637 = vmatpush1.msra.mxu0 %v180
  %638 = vmatprep.subr.mxu0 0.0
  %639 = vmatpush1.msra.mxu0 %v179
  %640 = vmatprep.subr.mxu0 0.0
  %641 = vmatpush1.msra.mxu0 %v178
  %642 = vmatprep.subr.mxu0 0.0
  %643 = vmatpush1.msra.mxu0 %v177
  %644 = vmatprep.subr.mxu0 0.0
  %645 = vmatpush1.msra.mxu0 %v176
  %646 = vmatprep.subr.mxu0 0.0
  %647 = vmatpush1.msra.mxu0 %v175
  %648 = vmatprep.subr.mxu0 0.0
  %649 = vmatpush1.msra.mxu0 %v174
  %650 = vmatprep.subr.mxu0 0.0
  %651 = vmatpush1.msra.mxu0 %v173
  %652 = vmatprep.subr.mxu0 0.0
  %653 = vmatpush1.msra.mxu0 %v172
  %654 = vmatprep.subr.mxu0 0.0
  %655 = vmatpush1.msra.mxu0 %v171
  %656 = vmatprep.subr.mxu0 0.0
  %657 = vmatpush1.msra.mxu0 %v170
  %658 = vmatprep.subr.mxu0 0.0
  %659 = vmatpush1.msra.mxu0 %v169
  %660 = vmatprep.subr.mxu0 0.0
  %661 = vmatpush1.msra.mxu0 %v168
  %662 = vmatprep.subr.mxu0 0.0
  %663 = vmatpush1.msra.mxu0 %v167
  %664 = vmatprep.subr.mxu0 0.0
  %665 = vmatpush1.msra.mxu0 %v166
  %666 = vmatprep.subr.mxu0 0.0
  %667 = vmatpush2.msra.mxu0 0.0
  %668 = vmatprep.subr.mxu0 0.0
  %669 = vmatpush2.msra.mxu0 0.0
  %670 = vmatprep.subr.mxu0 0.0
  %671 = vmatpush2.msra.mxu0 0.0
  %672 = vmatprep.subr.mxu0 0.0
  %673 = vmatpush2.msra.mxu0 0.0
  %674 = vmatprep.subr.mxu0 0.0
  %675 = vmatpush2.msra.mxu0 0.0
  %676 = vmatprep.subr.mxu0 0.0
  %677 = vmatpush2.msra.mxu0 0.0
  %678 = vmatprep.subr.mxu0 0.0
  %679 = vmatpush2.msra.mxu0 0.0
  %680 = vmatprep.subr.mxu0 0.0
  %681 = vmatpush2.msra.mxu0 0.0
  %682 = vmatprep.subr.mxu0 0.0
  %683 = vmatpush2.msra.mxu0 0.0
  %684 = vmatprep.subr.mxu0 0.0
  %685 = vmatpush2.msra.mxu0 0.0
  %686 = vmatprep.subr.mxu0 0.0
  %687 = vmatpush2.msra.mxu0 0.0
  %688 = vmatprep.subr.mxu0 0.0
  %689 = vmatpush2.msra.mxu0 0.0
  %690 = vmatprep.subr.mxu0 0.0
  %691 = vmatpush2.msra.mxu0 0.0
  %692 = vmatprep.subr.mxu0 0.0
  %693 = vmatpush2.msra.mxu0 0.0
  %694 = vmatprep.subr.mxu0 0.0
  %695 = vmatpush2.msra.mxu0 0.0
  %696 = vmatprep.subr.mxu0 0.0
  %697 = vmatpush2.msra.mxu0 0.0
  %698 = vmatprep.mubr.f32.mxu0 0.0
  %699 = vmatmul.mubr.f32.gmra.mxu0 %v630
  %v700 = vpop.f32.mrf.mxu0
  %v701 = vadd.f32 0.0, %v700
  %v702 = vpop.f32.mrf.mxu0
  %703 = vdwg.mxu0
  %v704 = vadd.f32 %v633, %v701
  %v705 = vtanh.pop %v704
  %706 = vst [vmem:[%s632] sm:$0xff] %v705
  %s707 = scalar_lea.vmem %s4, 56
  %v708 = vld [vmem:[%s707] sm:$0xff]
  %709 = vmatprep.subr.mxu0 0.0
  %710 = vmatpush1.msra.mxu0 %v181
  %711 = vmatprep.subr.mxu0 0.0
  %712 = vmatpush1.msra.mxu0 %v180
  %713 = vmatprep.subr.mxu0 0.0
  %714 = vmatpush1.msra.mxu0 %v179
  %715 = vmatprep.subr.mxu0 0.0
  %716 = vmatpush1.msra.mxu0 %v178
  %717 = vmatprep.subr.mxu0 0.0
  %718 = vmatpush1.msra.mxu0 %v177
  %719 = vmatprep.subr.mxu0 0.0
  %720 = vmatpush1.msra.mxu0 %v176
  %721 = vmatprep.subr.mxu0 0.0
  %722 = vmatpush1.msra.mxu0 %v175
  %723 = vmatprep.subr.mxu0 0.0
  %724 = vmatpush1.msra.mxu0 %v174
  %725 = vmatprep.subr.mxu0 0.0
  %726 = vmatpush1.msra.mxu0 %v173
  %727 = vmatprep.subr.mxu0 0.0
  %728 = vmatpush1.msra.mxu0 %v172
  %729 = vmatprep.subr.mxu0 0.0
  %730 = vmatpush1.msra.mxu0 %v171
  %731 = vmatprep.subr.mxu0 0.0
  %732 = vmatpush1.msra.mxu0 %v170
  %733 = vmatprep.subr.mxu0 0.0
  %734 = vmatpush1.msra.mxu0 %v169
  %735 = vmatprep.subr.mxu0 0.0
  %736 = vmatpush1.msra.mxu0 %v168
  %737 = vmatprep.subr.mxu0 0.0
  %738 = vmatpush1.msra.mxu0 %v167
  %739 = vmatprep.subr.mxu0 0.0
  %740 = vmatpush1.msra.mxu0 %v166
  %741 = vmatprep.subr.mxu0 0.0
  %742 = vmatpush2.msra.mxu0 0.0
  %743 = vmatprep.subr.mxu0 0.0
  %744 = vmatpush2.msra.mxu0 0.0
  %745 = vmatprep.subr.mxu0 0.0
  %746 = vmatpush2.msra.mxu0 0.0
  %747 = vmatprep.subr.mxu0 0.0
  %748 = vmatpush2.msra.mxu0 0.0
  %749 = vmatprep.subr.mxu0 0.0
  %750 = vmatpush2.msra.mxu0 0.0
  %751 = vmatprep.subr.mxu0 0.0
  %752 = vmatpush2.msra.mxu0 0.0
  %753 = vmatprep.subr.mxu0 0.0
  %754 = vmatpush2.msra.mxu0 0.0
  %755 = vmatprep.subr.mxu0 0.0
  %756 = vmatpush2.msra.mxu0 0.0
  %757 = vmatprep.subr.mxu0 0.0
  %758 = vmatpush2.msra.mxu0 0.0
  %759 = vmatprep.subr.mxu0 0.0
  %760 = vmatpush2.msra.mxu0 0.0
  %761 = vmatprep.subr.mxu0 0.0
  %762 = vmatpush2.msra.mxu0 0.0
  %763 = vmatprep.subr.mxu0 0.0
  %764 = vmatpush2.msra.mxu0 0.0
  %765 = vmatprep.subr.mxu0 0.0
  %766 = vmatpush2.msra.mxu0 0.0
  %767 = vmatprep.subr.mxu0 0.0
  %768 = vmatpush2.msra.mxu0 0.0
  %769 = vmatprep.subr.mxu0 0.0
  %770 = vmatpush2.msra.mxu0 0.0
  %771 = vmatprep.subr.mxu0 0.0
  %772 = vmatpush2.msra.mxu0 0.0
  %773 = vmatprep.mubr.f32.mxu0 0.0
  %774 = vmatmul.mubr.f32.gmra.mxu0 %v705
  %v775 = vpop.f32.mrf.mxu0
  %v776 = vadd.f32 0.0, %v775
  %v777 = vpop.f32.mrf.mxu0
  %778 = vdwg.mxu0
  %v779 = vadd.f32 %v708, %v776
  %v780 = vtanh.pop %v779
  %781 = vst [vmem:[%s707] sm:$0xff] %v780
  %782 = vst [vmem:[#allocation2] sm:$0xff] %v780
  // Predicated region
  $region22: #{_word_rnn_forward.1} parent=0 // pred_check
    _
  $region23: #{_word_rnn_forward.1} parent=0 // pred_check_branch
    %784 = sbr.rel (0) target = $region25
  $region24: #{_word_rnn_forward.1} parent=0 // pred_region
    _
  $region25: #{_word_rnn_forward.1} parent=0 // pred_fallthru
    _
  // Predicated region
  $region26: #{_word_rnn_forward.1} parent=0 // pred_check
    _
  $region27: #{_word_rnn_forward.1} parent=0 // pred_check_branch
    %786 = sbr.rel (0) target = $region29
  $region28: #{_word_rnn_forward.1} parent=0 // pred_region
    _
  $region29: #{_word_rnn_forward.1} parent=0 // pred_fallthru
    _

</llo_original>
